<compile_context>
chip_gen: v7x
topology: tpu7x:2x2x1
jax: 0.10.0
libtpu: 0.0.40
codegen_flags: <defaults>
</compile_context>

<pallas_src>
import functools

import jax
import jax.numpy as jnp
from jax.experimental import pallas as pl
from jax.experimental.pallas import tpu as pltpu


def _hsigmoid_kernel(x_ref, o_ref, *, bias, inv_divisor, min_value, max_value):
    # Elementwise: y = clip((x + bias) * (1/divisor), min, max).
    # Python-float constants are weak-typed -> math stays in the input dtype.
    x = x_ref[...]
    y = (x + bias) * inv_divisor
    o_ref[...] = jnp.clip(y, min_value, max_value).astype(o_ref.dtype)


def hsigmoid_ref(x, bias=3.0, divisor=6.0, min_value=0.0, max_value=1.0):
    return jnp.clip((x + bias) / divisor, min_value, max_value)


def _choose_cols(total, max_cols=2048):
    """Pick a lane-dense column count (multiple of 128) that divides `total`
    exactly, so the wrapper needs no padding copy. Prefer the largest such
    cols that still leaves >= 8 rows (sublane-friendly)."""
    if total % 128 != 0:
        return None
    k = total // 128
    best_any = None
    best_rows8 = None
    for d in range(1, max_cols // 128 + 1):
        if k % d == 0:
            cols = 128 * d
            best_any = cols
            if total // cols >= 8:
                best_rows8 = cols
    return best_rows8 if best_rows8 is not None else best_any


def hsigmoid(x, bias=3.0, divisor=6.0, min_value=0.0, max_value=1.0,
             target_tile_bytes=4 * 1024 * 1024, max_cols=2048,
             min_pallas_elems=1024):
    assert divisor != 0
    orig_shape = x.shape
    orig_dtype = x.dtype
    total = x.size

    cols = _choose_cols(total, max_cols=max_cols)
    # Tiny tensors (or no clean 128-multiple factorization): per-call overhead
    # and a padding copy would dominate; let XLA's fused elementwise handle it.
    if cols is None or total < min_pallas_elems:
        return hsigmoid_ref(x, bias, divisor, min_value, max_value).astype(orig_dtype)

    rows = total // cols
    x2d = x.reshape(rows, cols)  # exact factorization -> copy-free reshape

    itemsize = jnp.dtype(orig_dtype).itemsize
    # ~4 MiB tiles; 4 buffers (double-buffered in + out) stay well under the
    # 32 MiB scoped-VMEM limit set below (safe headroom even on v7x's 64 MiB).
    tile_rows = max(8, (target_tile_bytes // (cols * itemsize)) // 8 * 8)
    tile_rows = min(tile_rows, rows)
    # If everything fits in one block but there is enough work, split into
    # >= 2 grid steps so the single "parallel" axis can shard across the two
    # TensorCores of a v7x megacore.
    if pl.cdiv(rows, tile_rows) == 1 and rows >= 16:
        half = -(-rows // 2)
        tile_rows = max(8, ((half + 7) // 8) * 8)

    grid = (pl.cdiv(rows, tile_rows),)  # ragged last block is handled by Pallas

    kernel = functools.partial(
        _hsigmoid_kernel,
        bias=float(bias),
        inv_divisor=float(1.0 / divisor),
        min_value=float(min_value),
        max_value=float(max_value),
    )

    out2d = pl.pallas_call(
        kernel,
        out_shape=jax.ShapeDtypeStruct((rows, cols), orig_dtype),
        grid_spec=pltpu.PrefetchScalarGridSpec(
            num_scalar_prefetch=0,
            grid=grid,
            in_specs=[pl.BlockSpec((tile_rows, cols), lambda i: (i, 0))],
            out_specs=pl.BlockSpec((tile_rows, cols), lambda i: (i, 0)),
        ),
        compiler_params=pltpu.CompilerParams(
            dimension_semantics=("parallel",),
            vmem_limit_bytes=32 * 1024 * 1024,
        ),
    )(x2d)

    return out2d.reshape(orig_shape)


if __name__ == "__main__":
    key = jax.random.PRNGKey(0)
    k1, k2 = jax.random.split(key)

    # Small NCHW input, consistent with the PyTorch module's usage.
    x_small = jax.random.normal(k1, (2, 4, 16, 16), dtype=jnp.float32) * 4.0
    out_small = jax.block_until_ready(hsigmoid(x_small))
    ref_small = hsigmoid_ref(x_small)
    assert out_small.shape == x_small.shape and out_small.dtype == x_small.dtype
    assert jnp.allclose(out_small, ref_small, atol=1e-5, rtol=1e-5), "small mismatch"

    # Slightly larger case: exercises a multi-block grid and the ragged last block.
    x_big = jax.random.normal(k2, (2, 8, 48, 64), dtype=jnp.float32) * 4.0
    out_big = jax.block_until_ready(hsigmoid(x_big))
    ref_big = hsigmoid_ref(x_big)
    assert out_big.shape == x_big.shape and out_big.dtype == x_big.dtype
    assert jnp.allclose(out_big, ref_big, atol=1e-5, rtol=1e-5), "big mismatch"

    print("KERNEL_OK")
</pallas_src>

<mosaic_0001>
module attributes {stable_mosaic.version = 11 : i64} {
  func.func @_hsigmoid_kernel(%arg0: i32, %arg1: memref<8x256xf32, #tpu.memory_space<vmem>>, %arg2: memref<8x256xf32, #tpu.memory_space<vmem>>) attributes {dimension_semantics = [#tpu.dimension_semantics<parallel>], iteration_bounds = array<i64: 1>, scalar_prefetch = 0 : i64, scratch_operands = 0 : i64, tpu.core_type = #tpu.core_type<tc>, window_params = [{transform_indices = @transform_0, window_bounds = array<i64: 8, 256>}, {transform_indices = @transform_1, window_bounds = array<i64: 8, 256>}]} {
    %c0 = arith.constant 0 : index
    %c0_0 = arith.constant 0 : index
    %0 = vector.load %arg1[%c0, %c0_0] : memref<8x256xf32, #tpu.memory_space<vmem>>, vector<8x256xf32>
    %cst = arith.constant 3.000000e+00 : f32
    %1 = vector.broadcast %cst : f32 to vector<8x256xf32>
    %2 = arith.addf %0, %1 : vector<8x256xf32>
    %cst_1 = arith.constant 0.166666672 : f32
    %3 = vector.broadcast %cst_1 : f32 to vector<8x256xf32>
    %4 = arith.mulf %2, %3 : vector<8x256xf32>
    %cst_2 = arith.constant 0.000000e+00 : f32
    %cst_3 = arith.constant 1.000000e+00 : f32
    %5 = vector.broadcast %cst_2 : f32 to vector<8x256xf32>
    %6 = arith.maximumf %5, %4 : vector<8x256xf32>
    %7 = vector.broadcast %cst_3 : f32 to vector<8x256xf32>
    %8 = arith.minimumf %7, %6 : vector<8x256xf32>
    %c0_4 = arith.constant 0 : index
    %c0_5 = arith.constant 0 : index
    %9 = vector.load %arg2[%c0_4, %c0_5] : memref<8x256xf32, #tpu.memory_space<vmem>>, vector<8x256xf32>
    tpu.vector_store %arg2[%c0_4, %c0_5], %8 {strides = array<i32>} : memref<8x256xf32, #tpu.memory_space<vmem>>, vector<8x256xf32>,
    return
  }
  func.func @transform_0(%arg0: i32) -> (i32, i32) {
    %c0_i32 = arith.constant 0 : i32
    %c0_i32_0 = arith.constant 0 : i32
    return %arg0, %c0_i32 : i32, i32
  }
  func.func @transform_1(%arg0: i32) -> (i32, i32) {
    %c0_i32 = arith.constant 0 : i32
    %c0_i32_0 = arith.constant 0 : i32
    return %arg0, %c0_i32 : i32, i32
  }
}

</mosaic_0001>

<llo_original>
// kernel: tpu_custom_call.1
$region0: #{tpu_custom_call.1}
  #allocation0 [shape = 'u32[]', space=smem, size = 0x4, offset = 0x4, fixed_abs, tag = 'smem constant byte address 0x4 - core index']
  #allocation1 [shape = 'u32[144,128]{1,0:T(1,128)}', space=vmem, size = 0x12000, scoped, tag = 'internal scratch']
  %s0 = inlined_call_operand.hbm [shape: f32[8,256], index: 0, kind: input, shape index: {}]
  %s1 = inlined_call_operand.hbm [shape: f32[8,256], index: 1, kind: output, shape index: {}]
  %s2 = sld [smem:[#allocation0]]
  $region18: #{tpu_custom_call.1} parent=0
    _
  %s4 = ssub.s32 1, %s2
  %s5 = scalar_select 0, %s4, %s2
  $region1: #{tpu_custom_call.1} parent=0
    #allocation2 [shape = 'u8[8192]{0}', space=vmem, size = 0x2000, scoped, tag = 'input window, operand 0, single buffered']
    #allocation3 [shape = 's32[1]{0}', space=sflag, size = 0x4, scoped, tag = 'scoped memory for tpu_custom_call.1']
    #allocation4 [shape = 's32[1]{0}', space=sflag, size = 0x4, scoped, tag = 'scoped memory for tpu_custom_call.1']
    #allocation5 [shape = 'u8[8192]{0}', space=vmem, size = 0x2000, scoped, tag = 'output window, operand 0, single buffered']
    %6 = vsyncpa [#allocation3], 0
    %7 = vsyncpa [#allocation4], 0
    // Predicated region
    $region2: #{tpu_custom_call.1} parent=1 // pred_check
      _
    $region3: #{tpu_custom_call.1} parent=1 // pred_check_branch
      %9 = sbr.rel (0) target = $region5
    $region4: #{tpu_custom_call.1} parent=1 // pred_region
      %s11 = ssub.s32 256, 256
      %12 = vsyncadd [#allocation3], %s11
      %s14 = sshll.u32 [#allocation2], 4
      %s15 = int_to_ptr.vmem [resolvable:$true] %s14
      %17 = dma.hbm_to_vmem [thread:$0]  %s0, 256, %s15, [#allocation3]
    $region5: #{tpu_custom_call.1} parent=1 // pred_fallthru
      _
    // Predicated region
    $region6: #{tpu_custom_call.1} parent=1 // pred_check
      _
    $region7: #{tpu_custom_call.1} parent=1 // pred_check_branch
      %19 = sbr.rel (0) target = $region9
    $region8: #{tpu_custom_call.1} parent=1 // pred_region
      %20 = dma.done [#allocation3], 256
    $region9: #{tpu_custom_call.1} parent=1 // pred_fallthru
      _
    %v21 = vld [vmem:[#allocation2] sm:$0xff]
    %v22 = vld [vmem:[#allocation2 + $0x8] sm:$0xff]
    %v23 = vadd.f32 %v21, 3.0
    %v24 = vadd.f32 %v22, 3.0
    %v25 = vmul.f32 %v23, 0.16666667
    %v26 = vmul.f32 %v24, 0.16666667
    %v27 = vmax.f32 %v25, 0.0
    %v28 = vmax.f32 %v26, 0.0
    %v29 = vmin.f32 %v27, 1.0
    %v30 = vmin.f32 %v28, 1.0
    %31 = vst [vmem:[#allocation5] sm:$0xff] %v29
    %32 = vst [vmem:[#allocation5 + $0x8] sm:$0xff] %v30
    // Predicated region
    $region10: #{tpu_custom_call.1} parent=1 // pred_check
      _
    $region11: #{tpu_custom_call.1} parent=1 // pred_check_branch
      %34 = sbr.rel (0) target = $region13
    $region12: #{tpu_custom_call.1} parent=1 // pred_region
      %s36 = ssub.s32 256, 256
      %37 = vsyncadd [#allocation4], %s36
      %s39 = sshll.u32 [#allocation5], 4
      %s40 = int_to_ptr.vmem [resolvable:$true] %s39
      %42 = dma.vmem_to_hbm [thread:$0]  %s40, 256, %s1, [#allocation4]
    $region13: #{tpu_custom_call.1} parent=1 // pred_fallthru
      _
    // Predicated region
    $region14: #{tpu_custom_call.1} parent=1 // pred_check
      _
    $region15: #{tpu_custom_call.1} parent=1 // pred_check_branch
      %44 = sbr.rel (0) target = $region17
    $region16: #{tpu_custom_call.1} parent=1 // pred_region
      %45 = dma.done [#allocation4], 256
    $region17: #{tpu_custom_call.1} parent=1 // pred_fallthru
      _
    %46 = vsyncpa [#allocation3], 1
    %47 = vsyncpa [#allocation4], 1

</llo_original>
